<compile_context>
chip_gen: v6e
topology: v6e:2x2x1
jax: 0.10.0
libtpu: 0.0.40
codegen_flags: <defaults>
</compile_context>

<pallas_src>
import functools

import jax
import jax.numpy as jnp
from jax.experimental import pallas as pl
from jax.experimental.pallas import tpu as pltpu


# ---------------------------------------------------------------------------
# Small helpers.
# ---------------------------------------------------------------------------
def _round_up(x, m):
    return ((x + m - 1) // m) * m


def _pad_to(x, shape):
    pads = [(0, t - s) for s, t in zip(x.shape, shape)]
    if all(p == (0, 0) for p in pads):
        return x
    return jnp.pad(x, pads)


_VMEM_CAP_CACHE = [None]


def _vmem_capacity_bytes():
    """Generation-aware VMEM capacity; conservative 64 MiB (v7x per-TC) fallback."""
    if _VMEM_CAP_CACHE[0] is None:
        cap = 0
        try:
            cap = int(getattr(pltpu.get_tpu_info(), "vmem_capacity_bytes", 0))
        except Exception:
            cap = 0
        _VMEM_CAP_CACHE[0] = cap if cap > 0 else 64 * 1024 * 1024
    return _VMEM_CAP_CACHE[0]


# ---------------------------------------------------------------------------
# Fully-fused path (small graphs: everything resident in VMEM, one launch).
# ---------------------------------------------------------------------------
def _gmn_fused_kernel(x_ref, adj_ref, w1_ref, w2_ref, z_ref):
    adj = adj_ref[...]
    # nca1: X1 = H @ (X @ W1)
    wh1 = jnp.dot(x_ref[...], w1_ref[...], preferred_element_type=jnp.float32)
    x1 = jnp.dot(adj, wh1, preferred_element_type=jnp.float32)
    # nca2: z = H @ (X1 @ W2)
    wh2 = jnp.dot(x1, w2_ref[...], preferred_element_type=jnp.float32)
    z_ref[...] = jnp.dot(adj, wh2,
                         preferred_element_type=jnp.float32).astype(z_ref.dtype)


def gmn_fused(X, H, w1, w2, *, vmem_limit_bytes):
    """Single pallas_call computing H @ ((H @ (X @ W1)) @ W2), f32 exact.

    Feature dims are zero-padded to a multiple of 128 (lane-dense intermediates
    and unmasked output stores); padding with exact zeros does not change the
    f32 result, so this path stays numerically identical to the reference.
    """
    n, f_in = X.shape
    f_hid, f_out = w1.shape[1], w2.shape[1]
    f_hid_p = _round_up(f_hid, 128)
    f_out_p = _round_up(f_out, 128)
    w1p = _pad_to(w1, (f_in, f_hid_p))
    w2p = _pad_to(w2, (f_hid_p, f_out_p))

    z = pl.pallas_call(
        _gmn_fused_kernel,
        out_shape=jax.ShapeDtypeStruct((n, f_out_p), jnp.float32),
        grid_spec=pltpu.PrefetchScalarGridSpec(
            num_scalar_prefetch=0,
            grid=(1,),
            in_specs=[
                pl.BlockSpec((n, f_in), lambda i: (0, 0)),       # X (full)
                pl.BlockSpec((n, n), lambda i: (0, 0)),          # H (full)
                pl.BlockSpec((f_in, f_hid_p), lambda i: (0, 0)),  # W1 (padded)
                pl.BlockSpec((f_hid_p, f_out_p), lambda i: (0, 0)),  # W2 (padded)
            ],
            out_specs=pl.BlockSpec((n, f_out_p), lambda i: (0, 0)),
        ),
        compiler_params=pltpu.CompilerParams(
            dimension_semantics=("arbitrary",),
            vmem_limit_bytes=int(vmem_limit_bytes)),
    )(X, H, w1p, w2p)
    return z[:, :f_out] if f_out_p != f_out else z


def _fused_footprint_bytes(n, f_in, f_hid_p, f_out_p):
    """Rough fused-kernel VMEM footprint, including the 2x per-block buffers."""
    io_blocks = n * f_in + n * n + f_in * f_hid_p + f_hid_p * f_out_p + n * f_out_p
    temps = 2 * n * f_hid_p + n * f_out_p  # wh1, x1, wh2 intermediates
    return 4 * (2 * io_blocks + temps)


# ---------------------------------------------------------------------------
# Streaming path (large graphs): bf16 adjacency stream, K-tiled, f32 output
# block used as the accumulator (resident across the K axis).
# ---------------------------------------------------------------------------
def _adj_matmul_kernel(adj_ref, wh_ref, o_ref, *, tk, wh_resident):
    k = pl.program_id(1)

    @pl.when(k == 0)
    def _():
        o_ref[...] = jnp.zeros_like(o_ref)

    if wh_resident:
        start = pl.multiple_of(k * tk, tk)
        wh = wh_ref[pl.ds(start, tk), :]
    else:
        wh = wh_ref[...]
    # bf16 x bf16 -> f32 accumulate directly into the resident output block.
    o_ref[...] += jnp.dot(adj_ref[...], wh, preferred_element_type=jnp.float32)


def adj_matmul(adj_bf16, wh):
    """Computes adj @ wh.

    adj_bf16: (n_pad, n_pad) bfloat16, n_pad % 512 == 0 (zero padded).
    wh:       (n_pad, f) float (cast to bf16 + feature-padded to 128 here).
    Returns (n_pad, f) float32.
    """
    n_pad = adj_bf16.shape[0]
    f = wh.shape[1]
    f_pad = _round_up(f, 128)
    wh_p = _pad_to(wh, (n_pad, f_pad)).astype(jnp.bfloat16)

    # Tile selection: tm fixed at 512; tk the largest of (2048,1024,512) that
    # divides n_pad and keeps the double-buffered Wh slab under ~4 MiB.
    # Worst-case VMEM: adj 2*512*2048*2B = 4 MiB, out 2*512*f_pad*4B,
    # Wh <= 4 MiB  => <= ~8.5 MiB for f_pad=128, well under the v5e 16 MiB
    # default scoped limit and v7x's 64 MiB per-TC VMEM.
    tm = 512
    tk = 512
    for cand in (2048, 1024, 512):
        if n_pad % cand == 0 and 4 * cand * f_pad <= 4 * 1024 * 1024:
            tk = cand
            break

    # Keep Wh fully resident (fetched once) when it fits a 4 MiB budget,
    # eliminating the (n/tm)x redundant slab re-fetches.
    wh_resident = (n_pad * f_pad) <= (1 << 20)
    if wh_resident:
        wh_spec = pl.BlockSpec((n_pad, f_pad), lambda i, k: (0, 0))
    else:
        wh_spec = pl.BlockSpec((tk, f_pad), lambda i, k: (k, 0))

    kernel = functools.partial(_adj_matmul_kernel, tk=tk, wh_resident=wh_resident)

    out = pl.pallas_call(
        kernel,
        out_shape=jax.ShapeDtypeStruct((n_pad, f_pad), jnp.float32),
        grid_spec=pltpu.PrefetchScalarGridSpec(
            num_scalar_prefetch=0,
            grid=(n_pad // tm, n_pad // tk),
            in_specs=[
                pl.BlockSpec((tm, tk), lambda i, k: (i, k)),  # adjacency tile
                wh_spec,                                       # Wh (resident/slab)
            ],
            out_specs=pl.BlockSpec((tm, f_pad), lambda i, k: (i, 0)),
        ),
        compiler_params=pltpu.CompilerParams(
            dimension_semantics=("parallel", "arbitrary")),
    )(adj_bf16, wh_p)
    return out[:, :f] if f_pad != f else out


def gmn_streaming(X, H, w1, w2):
    """Large-graph forward: z = H @ ((H @ (X @ W1)) @ W2).

    n padded once to a multiple of 512; adjacency cast to bf16 once (halves the
    dominant HBM stream).  When f_out <= f_hid the product is reassociated as
    H @ (H @ (X @ (W1 @ W2))), shrinking both adjacency matmuls to width f_out.
    """
    n = X.shape[0]
    n_pad = _round_up(n, 512)
    f_hid, f_out = w1.shape[1], w2.shape[1]

    h_bf16 = _pad_to(H.astype(jnp.float32), (n_pad, n_pad)).astype(jnp.bfloat16)
    x_pad = _pad_to(X.astype(jnp.float32), (n_pad, X.shape[1]))

    if f_out <= f_hid:
        # Algebraic reassociation (validated vs reference within bf16 tolerance).
        w12 = jnp.dot(w1, w2, preferred_element_type=jnp.float32)
        y = jnp.dot(x_pad, w12, preferred_element_type=jnp.float32)
        y = adj_matmul(h_bf16, y)
        z = adj_matmul(h_bf16, y)
    else:
        y = adj_matmul(h_bf16, jnp.dot(x_pad, w1,
                                       preferred_element_type=jnp.float32))
        z = adj_matmul(h_bf16, jnp.dot(y, w2,
                                       preferred_element_type=jnp.float32))
    return z[:n, :f_out]


# ---------------------------------------------------------------------------
# Parameter init + forward.
# ---------------------------------------------------------------------------
def xavier_uniform(key, shape):
    fan_in, fan_out = shape
    bound = (6.0 / (fan_in + fan_out)) ** 0.5
    return jax.random.uniform(key, shape, dtype=jnp.float32,
                              minval=-bound, maxval=bound)


def init_gmn_params(key, in_features, hide_features, out_features):
    k1, k2 = jax.random.split(key, 2)
    return {
        "nca1_weight": xavier_uniform(k1, (in_features, hide_features)),
        "nca2_weight": xavier_uniform(k2, (hide_features, out_features)),
    }


@jax.jit
def gmn_forward(params, X, H):
    w1 = params["nca1_weight"]
    w2 = params["nca2_weight"]
    n, f_in = X.shape
    f_hid_p = _round_up(w1.shape[1], 128)
    f_out_p = _round_up(w2.shape[1], 128)

    # Generation-aware fused-path budget: leave 25% of VMEM (plus internal
    # scratch headroom) to the compiler; footprint already counts the 2x
    # per-block double-buffering.
    vmem_cap = _vmem_capacity_bytes()
    fused_limit = min(int(0.75 * vmem_cap), 96 * 1024 * 1024)
    fused_bytes = _fused_footprint_bytes(n, f_in, f_hid_p, f_out_p)

    if fused_bytes <= int(0.85 * fused_limit):
        # Single launch: both Mask layers fused, X1 never touches HBM.
        z = gmn_fused(X, H, w1, w2, vmem_limit_bytes=fused_limit)
    else:
        # Large-graph path: padded, bf16 adjacency stream, tiled accumulation.
        z = gmn_streaming(X, H, w1, w2)
    loss = jnp.float32(0.0)  # nca_loss1 + nca_loss2 == 0 in the gcn=False path
    return z, loss


def gmn_forward_ref(params, X, H):
    x1 = H @ (X @ params["nca1_weight"])
    z = H @ (x1 @ params["nca2_weight"])
    return z, jnp.float32(0.0)


if __name__ == "__main__":
    # Small graph: 128 nodes, in=64, hide=32, out=16
    num_nodes, in_features, hide_features, out_features = 128, 64, 32, 16

    key = jax.random.PRNGKey(0)
    k_params, k_x, k_adj = jax.random.split(key, 3)

    params = init_gmn_params(k_params, in_features, hide_features, out_features)
    X = jax.random.normal(k_x, (num_nodes, in_features), dtype=jnp.float32)
    # symmetric, row-normalized-ish adjacency
    A = (jax.random.uniform(k_adj, (num_nodes, num_nodes)) > 0.9).astype(jnp.float32)
    A = A + A.T + jnp.eye(num_nodes, dtype=jnp.float32)
    H = A / jnp.maximum(A.sum(axis=1, keepdims=True), 1.0)

    # Fused single-kernel path (chosen automatically at this size); f32 exact.
    z, loss = gmn_forward(params, X, H)
    jax.block_until_ready((z, loss))

    z_ref, loss_ref = gmn_forward_ref(params, X, H)
    assert z.shape == (num_nodes, out_features)
    assert jnp.allclose(z, z_ref, atol=1e-4, rtol=1e-4)
    assert float(loss) == float(loss_ref) == 0.0

    # Exercise the large-graph streaming path (padding + bf16 adjacency stream
    # + K-tiled accumulation); bf16 changes rounding, so looser tolerance.
    z_stream = jax.jit(gmn_streaming)(
        X, H, params["nca1_weight"], params["nca2_weight"])
    jax.block_until_ready(z_stream)
    assert z_stream.shape == (num_nodes, out_features)
    assert jnp.allclose(z_stream, z_ref, atol=1e-2, rtol=5e-2)

    # Non-128-aligned node count exercises the zero-padding path.
    n2 = 100
    X2, H2 = X[:n2], H[:n2, :n2]
    z2 = jax.jit(gmn_streaming)(
        X2, H2, params["nca1_weight"], params["nca2_weight"])
    jax.block_until_ready(z2)
    z2_ref = H2 @ ((H2 @ (X2 @ params["nca1_weight"])) @ params["nca2_weight"])
    assert z2.shape == (n2, out_features)
    assert jnp.allclose(z2, z2_ref, atol=1e-2, rtol=5e-2)

    print("KERNEL_OK")
</pallas_src>

<mosaic_0001>
module attributes {stable_mosaic.version = 11 : i64} {
  func.func @_gmn_fused_kernel(%arg0: i32, %arg1: memref<128x64xf32, #tpu.memory_space<vmem>>, %arg2: memref<128x128xf32, #tpu.memory_space<vmem>>, %arg3: memref<64x128xf32, #tpu.memory_space<vmem>>, %arg4: memref<128x128xf32, #tpu.memory_space<vmem>>, %arg5: memref<128x128xf32, #tpu.memory_space<vmem>>) attributes {dimension_semantics = [#tpu.dimension_semantics<arbitrary>], iteration_bounds = array<i64: 1>, scalar_prefetch = 0 : i64, scratch_operands = 0 : i64, tpu.core_type = #tpu.core_type<tc>, window_params = [{pipeline_mode = #tpu.pipeline_mode<synchronous>, transform_indices = @transform_0, window_bounds = array<i64: 128, 64>}, {pipeline_mode = #tpu.pipeline_mode<synchronous>, transform_indices = @transform_1, window_bounds = array<i64: 128, 128>}, {pipeline_mode = #tpu.pipeline_mode<synchronous>, transform_indices = @transform_2, window_bounds = array<i64: 64, 128>}, {pipeline_mode = #tpu.pipeline_mode<synchronous>, transform_indices = @transform_3, window_bounds = array<i64: 128, 128>}, {pipeline_mode = #tpu.pipeline_mode<synchronous>, transform_indices = @transform_4, window_bounds = array<i64: 128, 128>}]} {
    %c0 = arith.constant 0 : index
    %c0_0 = arith.constant 0 : index
    %0 = vector.load %arg2[%c0, %c0_0] : memref<128x128xf32, #tpu.memory_space<vmem>>, vector<128x128xf32>
    %c0_1 = arith.constant 0 : index
    %c0_2 = arith.constant 0 : index
    %1 = vector.load %arg1[%c0_1, %c0_2] : memref<128x64xf32, #tpu.memory_space<vmem>>, vector<128x64xf32>
    %c0_3 = arith.constant 0 : index
    %c0_4 = arith.constant 0 : index
    %2 = vector.load %arg3[%c0_3, %c0_4] : memref<64x128xf32, #tpu.memory_space<vmem>>, vector<64x128xf32>
    %cst = arith.constant dense<0.000000e+00> : vector<128x128xf32>
    %3 = tpu.matmul %1, %2, %cst {dimension_numbers = #tpu.dot_dimension_numbers<[1], [0], [0], [1], [0, 0, 1, 1], [], []>} : vector<128x64xf32>, vector<64x128xf32>, vector<128x128xf32> -> vector<128x128xf32>
    %cst_5 = arith.constant dense<0.000000e+00> : vector<128x128xf32>
    %4 = tpu.matmul %0, %3, %cst_5 {dimension_numbers = #tpu.dot_dimension_numbers<[1], [0], [0], [1], [0, 0, 1, 1], [], []>} : vector<128x128xf32>, vector<128x128xf32>, vector<128x128xf32> -> vector<128x128xf32>
    %c0_6 = arith.constant 0 : index
    %c0_7 = arith.constant 0 : index
    %5 = vector.load %arg4[%c0_6, %c0_7] : memref<128x128xf32, #tpu.memory_space<vmem>>, vector<128x128xf32>
    %cst_8 = arith.constant dense<0.000000e+00> : vector<128x128xf32>
    %6 = tpu.matmul %4, %5, %cst_8 {dimension_numbers = #tpu.dot_dimension_numbers<[1], [0], [0], [1], [0, 0, 1, 1], [], []>} : vector<128x128xf32>, vector<128x128xf32>, vector<128x128xf32> -> vector<128x128xf32>
    %cst_9 = arith.constant dense<0.000000e+00> : vector<128x128xf32>
    %7 = tpu.matmul %0, %6, %cst_9 {dimension_numbers = #tpu.dot_dimension_numbers<[1], [0], [0], [1], [0, 0, 1, 1], [], []>} : vector<128x128xf32>, vector<128x128xf32>, vector<128x128xf32> -> vector<128x128xf32>
    %c0_10 = arith.constant 0 : index
    %c0_11 = arith.constant 0 : index
    %8 = vector.load %arg5[%c0_10, %c0_11] : memref<128x128xf32, #tpu.memory_space<vmem>>, vector<128x128xf32>
    tpu.vector_store %arg5[%c0_10, %c0_11], %7 {strides = array<i32>} : memref<128x128xf32, #tpu.memory_space<vmem>>, vector<128x128xf32>,
    return
  }
  func.func @transform_0(%arg0: i32) -> (i32, i32) {
    %c0_i32 = arith.constant 0 : i32
    %c0_i32_0 = arith.constant 0 : i32
    %c0_i32_1 = arith.constant 0 : i32
    return %c0_i32, %c0_i32_0 : i32, i32
  }
  func.func @transform_1(%arg0: i32) -> (i32, i32) {
    %c0_i32 = arith.constant 0 : i32
    %c0_i32_0 = arith.constant 0 : i32
    %c0_i32_1 = arith.constant 0 : i32
    return %c0_i32, %c0_i32_0 : i32, i32
  }
  func.func @transform_2(%arg0: i32) -> (i32, i32) {
    %c0_i32 = arith.constant 0 : i32
    %c0_i32_0 = arith.constant 0 : i32
    %c0_i32_1 = arith.constant 0 : i32
    return %c0_i32, %c0_i32_0 : i32, i32
  }
  func.func @transform_3(%arg0: i32) -> (i32, i32) {
    %c0_i32 = arith.constant 0 : i32
    %c0_i32_0 = arith.constant 0 : i32
    %c0_i32_1 = arith.constant 0 : i32
    return %c0_i32, %c0_i32_0 : i32, i32
  }
  func.func @transform_4(%arg0: i32) -> (i32, i32) {
    %c0_i32 = arith.constant 0 : i32
    %c0_i32_0 = arith.constant 0 : i32
    %c0_i32_1 = arith.constant 0 : i32
    return %c0_i32, %c0_i32_0 : i32, i32
  }
}

</mosaic_0001>

<llo_original>
// kernel: gmn_forward.1
$region0: #{gmn_forward.1}
  #allocation0 [shape = 'u32[]', space=smem, size = 0x4, offset = 0x4, fixed_abs, tag = 'smem constant byte address 0x4 - core index']
  #allocation1 [shape = 'u32[144,128]{1,0:T(1,128)}', space=vmem, size = 0x12000, scoped, tag = 'internal scratch']
  %s0 = inlined_call_operand.vmem [shape: f32[128,64], index: 0, kind: input, shape index: {}]
  %s1 = inlined_call_operand.vmem [shape: f32[128,128], index: 1, kind: input, shape index: {}]
  %s2 = inlined_call_operand.vmem [shape: f32[64,128], index: 2, kind: input, shape index: {}]
  %s3 = inlined_call_operand.vmem [shape: f32[128,128], index: 3, kind: input, shape index: {}]
  %s4 = inlined_call_operand.vmem [shape: f32[128,128], index: 4, kind: output, shape index: {}]
  %s5 = sld [smem:[#allocation0]]
  $region26: #{gmn_forward.1} parent=0
    _
  %s7 = ssub.s32 1, %s5
  %s8 = scalar_select 0, %s7, %s5
  // Predicated region
  $region2: #{gmn_forward.1} parent=0 // pred_check
    _
  $region3: #{gmn_forward.1} parent=0 // pred_check_branch
    %10 = sbr.rel (0) target = $region5
  $region4: #{gmn_forward.1} parent=0 // pred_region
    _
  $region5: #{gmn_forward.1} parent=0 // pred_fallthru
    _
  // Predicated region
  $region6: #{gmn_forward.1} parent=0 // pred_check
    _
  $region7: #{gmn_forward.1} parent=0 // pred_check_branch
    %12 = sbr.rel (0) target = $region9
  $region8: #{gmn_forward.1} parent=0 // pred_region
    _
  $region9: #{gmn_forward.1} parent=0 // pred_fallthru
    _
  // Predicated region
  $region10: #{gmn_forward.1} parent=0 // pred_check
    _
  $region11: #{gmn_forward.1} parent=0 // pred_check_branch
    %14 = sbr.rel (0) target = $region13
  $region12: #{gmn_forward.1} parent=0 // pred_region
    _
  $region13: #{gmn_forward.1} parent=0 // pred_fallthru
    _
  // Predicated region
  $region14: #{gmn_forward.1} parent=0 // pred_check
    _
  $region15: #{gmn_forward.1} parent=0 // pred_check_branch
    %16 = sbr.rel (0) target = $region17
  $region16: #{gmn_forward.1} parent=0 // pred_region
    _
  $region17: #{gmn_forward.1} parent=0 // pred_fallthru
    _
  %v17 = vld [vmem:[%s1] sm:$0xff]
  %v18 = vld [vmem:[%s1 + $0x8] sm:$0xff]
  %v19 = vld [vmem:[%s1 + $0x10] sm:$0xff]
  %v20 = vld [vmem:[%s1 + $0x18] sm:$0xff]
  %v21 = vld [vmem:[%s1 + $0x20] sm:$0xff]
  %v22 = vld [vmem:[%s1 + $0x28] sm:$0xff]
  %v23 = vld [vmem:[%s1 + $0x30] sm:$0xff]
  %v24 = vld [vmem:[%s1 + $0x38] sm:$0xff]
  %v25 = vld [vmem:[%s1 + $0x40] sm:$0xff]
  %v26 = vld [vmem:[%s1 + $0x48] sm:$0xff]
  %v27 = vld [vmem:[%s1 + $0x50] sm:$0xff]
  %v28 = vld [vmem:[%s1 + $0x58] sm:$0xff]
  %v29 = vld [vmem:[%s1 + $0x60] sm:$0xff]
  %v30 = vld [vmem:[%s1 + $0x68] sm:$0xff]
  %v31 = vld [vmem:[%s1 + $0x70] sm:$0xff]
  %v32 = vld [vmem:[%s1 + $0x78] sm:$0xff]
  %v33 = vld [vmem:[%s0] sm:$0xff]
  %v34 = vld [vmem:[%s0 + $0x8] sm:$0xff]
  %v35 = vld [vmem:[%s0 + $0x10] sm:$0xff]
  %v36 = vld [vmem:[%s0 + $0x18] sm:$0xff]
  %v37 = vld [vmem:[%s0 + $0x20] sm:$0xff]
  %v38 = vld [vmem:[%s0 + $0x28] sm:$0xff]
  %v39 = vld [vmem:[%s0 + $0x30] sm:$0xff]
  %v40 = vld [vmem:[%s0 + $0x38] sm:$0xff]
  %v41 = vld [vmem:[%s0 + $0x40] sm:$0xff]
  %v42 = vld [vmem:[%s0 + $0x48] sm:$0xff]
  %v43 = vld [vmem:[%s0 + $0x50] sm:$0xff]
  %v44 = vld [vmem:[%s0 + $0x58] sm:$0xff]
  %v45 = vld [vmem:[%s0 + $0x60] sm:$0xff]
  %v46 = vld [vmem:[%s0 + $0x68] sm:$0xff]
  %v47 = vld [vmem:[%s0 + $0x70] sm:$0xff]
  %v48 = vld [vmem:[%s0 + $0x78] sm:$0xff]
  %v49 = vld [vmem:[%s2] sm:$0xff]
  %v50 = vld [vmem:[%s2 + $0x8] sm:$0xff]
  %v51 = vld [vmem:[%s2 + $0x10] sm:$0xff]
  %v52 = vld [vmem:[%s2 + $0x18] sm:$0xff]
  %v53 = vld [vmem:[%s2 + $0x20] sm:$0xff]
  %v54 = vld [vmem:[%s2 + $0x28] sm:$0xff]
  %v55 = vld [vmem:[%s2 + $0x30] sm:$0xff]
  %v56 = vld [vmem:[%s2 + $0x38] sm:$0xff]
  %vm57 = vcmask 523264
  %v59 = vsel %vm57, %v33, 0
  %v62 = vsel %vm57, %v34, 0
  %v65 = vsel %vm57, %v35, 0
  %v68 = vsel %vm57, %v36, 0
  %v71 = vsel %vm57, %v37, 0
  %v74 = vsel %vm57, %v38, 0
  %v77 = vsel %vm57, %v39, 0
  %v80 = vsel %vm57, %v40, 0
  %v83 = vsel %vm57, %v41, 0
  %v86 = vsel %vm57, %v42, 0
  %v89 = vsel %vm57, %v43, 0
  %v92 = vsel %vm57, %v44, 0
  %v95 = vsel %vm57, %v45, 0
  %v98 = vsel %vm57, %v46, 0
  %v101 = vsel %vm57, %v47, 0
  %v104 = vsel %vm57, %v48, 0
  %106 = vmatprep.subr.mxu0 0.0
  %107 = vmatpush1.msra.mxu0 0.0
  %108 = vmatprep.subr.mxu0 0.0
  %109 = vmatpush1.msra.mxu0 0.0
  %110 = vmatprep.subr.mxu0 0.0
  %111 = vmatpush1.msra.mxu0 0.0
  %112 = vmatprep.subr.mxu0 0.0
  %113 = vmatpush1.msra.mxu0 0.0
  %114 = vmatprep.subr.mxu0 0.0
  %115 = vmatpush1.msra.mxu0 0.0
  %116 = vmatprep.subr.mxu0 0.0
  %117 = vmatpush1.msra.mxu0 0.0
  %118 = vmatprep.subr.mxu0 0.0
  %119 = vmatpush1.msra.mxu0 0.0
  %120 = vmatprep.subr.mxu0 0.0
  %121 = vmatpush1.msra.mxu0 0.0
  %122 = vmatprep.subr.mxu0 0.0
  %123 = vmatpush1.msra.mxu0 %v56
  %124 = vmatprep.subr.mxu0 0.0
  %125 = vmatpush1.msra.mxu0 %v55
  %126 = vmatprep.subr.mxu0 0.0
  %127 = vmatpush1.msra.mxu0 %v54
  %128 = vmatprep.subr.mxu0 0.0
  %129 = vmatpush1.msra.mxu0 %v53
  %130 = vmatprep.subr.mxu0 0.0
  %131 = vmatpush1.msra.mxu0 %v52
  %132 = vmatprep.subr.mxu0 0.0
  %133 = vmatpush1.msra.mxu0 %v51
  %134 = vmatprep.subr.mxu0 0.0
  %135 = vmatpush1.msra.mxu0 %v50
  %136 = vmatprep.subr.mxu0 0.0
  %137 = vmatpush1.msra.mxu0 %v49
  %138 = vmatprep.subr.mxu0 0.0
  %139 = vmatpush2.msra.mxu0 0.0
  %140 = vmatprep.subr.mxu0 0.0
  %141 = vmatpush2.msra.mxu0 0.0
  %142 = vmatprep.subr.mxu0 0.0
  %143 = vmatpush2.msra.mxu0 0.0
  %144 = vmatprep.subr.mxu0 0.0
  %145 = vmatpush2.msra.mxu0 0.0
  %146 = vmatprep.subr.mxu0 0.0
  %147 = vmatpush2.msra.mxu0 0.0
  %148 = vmatprep.subr.mxu0 0.0
  %149 = vmatpush2.msra.mxu0 0.0
  %150 = vmatprep.subr.mxu0 0.0
  %151 = vmatpush2.msra.mxu0 0.0
  %152 = vmatprep.subr.mxu0 0.0
  %153 = vmatpush2.msra.mxu0 0.0
  %154 = vmatprep.subr.mxu0 0.0
  %155 = vmatpush2.msra.mxu0 0.0
  %156 = vmatprep.subr.mxu0 0.0
  %157 = vmatpush2.msra.mxu0 0.0
  %158 = vmatprep.subr.mxu0 0.0
  %159 = vmatpush2.msra.mxu0 0.0
  %160 = vmatprep.subr.mxu0 0.0
  %161 = vmatpush2.msra.mxu0 0.0
  %162 = vmatprep.subr.mxu0 0.0
  %163 = vmatpush2.msra.mxu0 0.0
  %164 = vmatprep.subr.mxu0 0.0
  %165 = vmatpush2.msra.mxu0 0.0
  %166 = vmatprep.subr.mxu0 0.0
  %167 = vmatpush2.msra.mxu0 0.0
  %168 = vmatprep.subr.mxu0 0.0
  %169 = vmatpush2.msra.mxu0 0.0
  %170 = vmatprep.mubr.f32.mxu0 0.0
  %171 = vmatmul.mubr.f32.gmra.mxu0 %v59
  %v172 = vpop.f32.mrf.mxu0
  %v173 = vadd.f32 0.0, %v172
  %v174 = vpop.f32.mrf.mxu0
  %175 = vmatprep.mubr.f32.mxu0 0.0
  %176 = vmatmul.mubr.f32.gmra.mxu0 %v62
  %v177 = vpop.f32.mrf.mxu0
  %v178 = vadd.f32 0.0, %v177
  %v179 = vpop.f32.mrf.mxu0
  %180 = vmatprep.mubr.f32.mxu0 0.0
  %181 = vmatmul.mubr.f32.gmra.mxu0 %v65
  %v182 = vpop.f32.mrf.mxu0
  %v183 = vadd.f32 0.0, %v182
  %v184 = vpop.f32.mrf.mxu0
  %185 = vmatprep.mubr.f32.mxu0 0.0
  %186 = vmatmul.mubr.f32.gmra.mxu0 %v68
  %v187 = vpop.f32.mrf.mxu0
  %v188 = vadd.f32 0.0, %v187
  %v189 = vpop.f32.mrf.mxu0
  %190 = vmatprep.mubr.f32.mxu0 0.0
  %191 = vmatmul.mubr.f32.gmra.mxu0 %v71
  %v192 = vpop.f32.mrf.mxu0
  %v193 = vadd.f32 0.0, %v192
  %v194 = vpop.f32.mrf.mxu0
  %195 = vmatprep.mubr.f32.mxu0 0.0
  %196 = vmatmul.mubr.f32.gmra.mxu0 %v74
  %v197 = vpop.f32.mrf.mxu0
  %v198 = vadd.f32 0.0, %v197
  %v199 = vpop.f32.mrf.mxu0
  %200 = vmatprep.mubr.f32.mxu0 0.0
  %201 = vmatmul.mubr.f32.gmra.mxu0 %v77
  %v202 = vpop.f32.mrf.mxu0
  %v203 = vadd.f32 0.0, %v202
  %v204 = vpop.f32.mrf.mxu0
  %205 = vmatprep.mubr.f32.mxu0 0.0
  %206 = vmatmul.mubr.f32.gmra.mxu0 %v80
  %v207 = vpop.f32.mrf.mxu0
  %v208 = vadd.f32 0.0, %v207
  %v209 = vpop.f32.mrf.mxu0
  %210 = vmatprep.mubr.f32.mxu0 0.0
  %211 = vmatmul.mubr.f32.gmra.mxu0 %v83
  %v212 = vpop.f32.mrf.mxu0
  %v213 = vadd.f32 0.0, %v212
  %v214 = vpop.f32.mrf.mxu0
  %215 = vmatprep.mubr.f32.mxu0 0.0
  %216 = vmatmul.mubr.f32.gmra.mxu0 %v86
  %v217 = vpop.f32.mrf.mxu0
  %v218 = vadd.f32 0.0, %v217
  %v219 = vpop.f32.mrf.mxu0
  %220 = vmatprep.mubr.f32.mxu0 0.0
  %221 = vmatmul.mubr.f32.gmra.mxu0 %v89
  %v222 = vpop.f32.mrf.mxu0
  %v223 = vadd.f32 0.0, %v222
  %v224 = vpop.f32.mrf.mxu0
  %225 = vmatprep.mubr.f32.mxu0 0.0
  %226 = vmatmul.mubr.f32.gmra.mxu0 %v92
  %v227 = vpop.f32.mrf.mxu0
  %v228 = vadd.f32 0.0, %v227
  %v229 = vpop.f32.mrf.mxu0
  %230 = vmatprep.mubr.f32.mxu0 0.0
  %231 = vmatmul.mubr.f32.gmra.mxu0 %v95
  %v232 = vpop.f32.mrf.mxu0
  %v233 = vadd.f32 0.0, %v232
  %v234 = vpop.f32.mrf.mxu0
  %235 = vmatprep.mubr.f32.mxu0 0.0
  %236 = vmatmul.mubr.f32.gmra.mxu0 %v98
  %v237 = vpop.f32.mrf.mxu0
  %v238 = vadd.f32 0.0, %v237
  %v239 = vpop.f32.mrf.mxu0
  %240 = vmatprep.mubr.f32.mxu0 0.0
  %241 = vmatmul.mubr.f32.gmra.mxu0 %v101
  %v242 = vpop.f32.mrf.mxu0
  %v243 = vadd.f32 0.0, %v242
  %v244 = vpop.f32.mrf.mxu0
  %245 = vmatprep.mubr.f32.mxu0 0.0
  %246 = vmatmul.mubr.f32.gmra.mxu0 %v104
  %v247 = vpop.f32.mrf.mxu0
  %v248 = vadd.f32 0.0, %v247
  %v249 = vpop.f32.mrf.mxu0
  %250 = vdwg.mxu0
  %251 = vmatprep.subr.mxu0 0.0
  %252 = vmatpush1.msra.mxu0 %v248
  %253 = vmatprep.subr.mxu0 0.0
  %254 = vmatpush1.msra.mxu0 %v243
  %255 = vmatprep.subr.mxu0 0.0
  %256 = vmatpush1.msra.mxu0 %v238
  %257 = vmatprep.subr.mxu0 0.0
  %258 = vmatpush1.msra.mxu0 %v233
  %259 = vmatprep.subr.mxu0 0.0
  %260 = vmatpush1.msra.mxu0 %v228
  %261 = vmatprep.subr.mxu0 0.0
  %262 = vmatpush1.msra.mxu0 %v223
  %263 = vmatprep.subr.mxu0 0.0
  %264 = vmatpush1.msra.mxu0 %v218
  %265 = vmatprep.subr.mxu0 0.0
  %266 = vmatpush1.msra.mxu0 %v213
  %267 = vmatprep.subr.mxu0 0.0
  %268 = vmatpush1.msra.mxu0 %v208
  %269 = vmatprep.subr.mxu0 0.0
  %270 = vmatpush1.msra.mxu0 %v203
  %271 = vmatprep.subr.mxu0 0.0
  %272 = vmatpush1.msra.mxu0 %v198
  %273 = vmatprep.subr.mxu0 0.0
  %274 = vmatpush1.msra.mxu0 %v193
  %275 = vmatprep.subr.mxu0 0.0
  %276 = vmatpush1.msra.mxu0 %v188
  %277 = vmatprep.subr.mxu0 0.0
  %278 = vmatpush1.msra.mxu0 %v183
  %279 = vmatprep.subr.mxu0 0.0
  %280 = vmatpush1.msra.mxu0 %v178
  %281 = vmatprep.subr.mxu0 0.0
  %282 = vmatpush1.msra.mxu0 %v173
  %283 = vmatprep.subr.mxu0 0.0
  %284 = vmatpush2.msra.mxu0 0.0
  %285 = vmatprep.subr.mxu0 0.0
  %286 = vmatpush2.msra.mxu0 0.0
  %287 = vmatprep.subr.mxu0 0.0
  %288 = vmatpush2.msra.mxu0 0.0
  %289 = vmatprep.subr.mxu0 0.0
  %290 = vmatpush2.msra.mxu0 0.0
  %291 = vmatprep.subr.mxu0 0.0
  %292 = vmatpush2.msra.mxu0 0.0
  %293 = vmatprep.subr.mxu0 0.0
  %294 = vmatpush2.msra.mxu0 0.0
  %295 = vmatprep.subr.mxu0 0.0
  %296 = vmatpush2.msra.mxu0 0.0
  %297 = vmatprep.subr.mxu0 0.0
  %298 = vmatpush2.msra.mxu0 0.0
  %299 = vmatprep.subr.mxu0 0.0
  %300 = vmatpush2.msra.mxu0 0.0
  %301 = vmatprep.subr.mxu0 0.0
  %302 = vmatpush2.msra.mxu0 0.0
  %303 = vmatprep.subr.mxu0 0.0
  %304 = vmatpush2.msra.mxu0 0.0
  %305 = vmatprep.subr.mxu0 0.0
  %306 = vmatpush2.msra.mxu0 0.0
  %307 = vmatprep.subr.mxu0 0.0
  %308 = vmatpush2.msra.mxu0 0.0
  %309 = vmatprep.subr.mxu0 0.0
  %310 = vmatpush2.msra.mxu0 0.0
  %311 = vmatprep.subr.mxu0 0.0
  %312 = vmatpush2.msra.mxu0 0.0
  %313 = vmatprep.subr.mxu0 0.0
  %314 = vmatpush2.msra.mxu0 0.0
  %315 = vmatprep.mubr.f32.mxu0 0.0
  %316 = vmatmul.mubr.f32.gmra.mxu0 %v17
  %v317 = vpop.f32.mrf.mxu0
  %v318 = vadd.f32 0.0, %v317
  %v319 = vpop.f32.mrf.mxu0
  %320 = vmatprep.mubr.f32.mxu0 0.0
  %321 = vmatmul.mubr.f32.gmra.mxu0 %v18
  %v322 = vpop.f32.mrf.mxu0
  %v323 = vadd.f32 0.0, %v322
  %v324 = vpop.f32.mrf.mxu0
  %325 = vmatprep.mubr.f32.mxu0 0.0
  %326 = vmatmul.mubr.f32.gmra.mxu0 %v19
  %v327 = vpop.f32.mrf.mxu0
  %v328 = vadd.f32 0.0, %v327
  %v329 = vpop.f32.mrf.mxu0
  %330 = vmatprep.mubr.f32.mxu0 0.0
  %331 = vmatmul.mubr.f32.gmra.mxu0 %v20
  %v332 = vpop.f32.mrf.mxu0
  %v333 = vadd.f32 0.0, %v332
  %v334 = vpop.f32.mrf.mxu0
  %335 = vmatprep.mubr.f32.mxu0 0.0
  %336 = vmatmul.mubr.f32.gmra.mxu0 %v21
  %v337 = vpop.f32.mrf.mxu0
  %v338 = vadd.f32 0.0, %v337
  %v339 = vpop.f32.mrf.mxu0
  %340 = vmatprep.mubr.f32.mxu0 0.0
  %341 = vmatmul.mubr.f32.gmra.mxu0 %v22
  %v342 = vpop.f32.mrf.mxu0
  %v343 = vadd.f32 0.0, %v342
  %v344 = vpop.f32.mrf.mxu0
  %345 = vmatprep.mubr.f32.mxu0 0.0
  %346 = vmatmul.mubr.f32.gmra.mxu0 %v23
  %v347 = vpop.f32.mrf.mxu0
  %v348 = vadd.f32 0.0, %v347
  %v349 = vpop.f32.mrf.mxu0
  %350 = vmatprep.mubr.f32.mxu0 0.0
  %351 = vmatmul.mubr.f32.gmra.mxu0 %v24
  %v352 = vpop.f32.mrf.mxu0
  %v353 = vadd.f32 0.0, %v352
  %v354 = vpop.f32.mrf.mxu0
  %355 = vmatprep.mubr.f32.mxu0 0.0
  %356 = vmatmul.mubr.f32.gmra.mxu0 %v25
  %v357 = vpop.f32.mrf.mxu0
  %v358 = vadd.f32 0.0, %v357
  %v359 = vpop.f32.mrf.mxu0
  %360 = vmatprep.mubr.f32.mxu0 0.0
  %361 = vmatmul.mubr.f32.gmra.mxu0 %v26
  %v362 = vpop.f32.mrf.mxu0
  %v363 = vadd.f32 0.0, %v362
  %v364 = vpop.f32.mrf.mxu0
  %365 = vmatprep.mubr.f32.mxu0 0.0
  %366 = vmatmul.mubr.f32.gmra.mxu0 %v27
  %v367 = vpop.f32.mrf.mxu0
  %v368 = vadd.f32 0.0, %v367
  %v369 = vpop.f32.mrf.mxu0
  %370 = vmatprep.mubr.f32.mxu0 0.0
  %371 = vmatmul.mubr.f32.gmra.mxu0 %v28
  %v372 = vpop.f32.mrf.mxu0
  %v373 = vadd.f32 0.0, %v372
  %v374 = vpop.f32.mrf.mxu0
  %375 = vmatprep.mubr.f32.mxu0 0.0
  %376 = vmatmul.mubr.f32.gmra.mxu0 %v29
  %v377 = vpop.f32.mrf.mxu0
  %v378 = vadd.f32 0.0, %v377
  %v379 = vpop.f32.mrf.mxu0
  %380 = vmatprep.mubr.f32.mxu0 0.0
  %381 = vmatmul.mubr.f32.gmra.mxu0 %v30
  %v382 = vpop.f32.mrf.mxu0
  %v383 = vadd.f32 0.0, %v382
  %v384 = vpop.f32.mrf.mxu0
  %385 = vmatprep.mubr.f32.mxu0 0.0
  %386 = vmatmul.mubr.f32.gmra.mxu0 %v31
  %v387 = vpop.f32.mrf.mxu0
  %v388 = vadd.f32 0.0, %v387
  %v389 = vpop.f32.mrf.mxu0
  %390 = vmatprep.mubr.f32.mxu0 0.0
  %391 = vmatmul.mubr.f32.gmra.mxu0 %v32
  %v392 = vpop.f32.mrf.mxu0
  %v393 = vadd.f32 0.0, %v392
  %v394 = vpop.f32.mrf.mxu0
  %395 = vdwg.mxu0
  %v396 = vld [vmem:[%s3] sm:$0xff]
  %v397 = vld [vmem:[%s3 + $0x8] sm:$0xff]
  %v398 = vld [vmem:[%s3 + $0x10] sm:$0xff]
  %v399 = vld [vmem:[%s3 + $0x18] sm:$0xff]
  %v400 = vld [vmem:[%s3 + $0x20] sm:$0xff]
  %v401 = vld [vmem:[%s3 + $0x28] sm:$0xff]
  %v402 = vld [vmem:[%s3 + $0x30] sm:$0xff]
  %v403 = vld [vmem:[%s3 + $0x38] sm:$0xff]
  %v404 = vld [vmem:[%s3 + $0x40] sm:$0xff]
  %v405 = vld [vmem:[%s3 + $0x48] sm:$0xff]
  %v406 = vld [vmem:[%s3 + $0x50] sm:$0xff]
  %v407 = vld [vmem:[%s3 + $0x58] sm:$0xff]
  %v408 = vld [vmem:[%s3 + $0x60] sm:$0xff]
  %v409 = vld [vmem:[%s3 + $0x68] sm:$0xff]
  %v410 = vld [vmem:[%s3 + $0x70] sm:$0xff]
  %v411 = vld [vmem:[%s3 + $0x78] sm:$0xff]
  %412 = vmatprep.subr.mxu0 0.0
  %413 = vmatpush1.msra.mxu0 %v411
  %414 = vmatprep.subr.mxu0 0.0
  %415 = vmatpush1.msra.mxu0 %v410
  %416 = vmatprep.subr.mxu0 0.0
  %417 = vmatpush1.msra.mxu0 %v409
  %418 = vmatprep.subr.mxu0 0.0
  %419 = vmatpush1.msra.mxu0 %v408
  %420 = vmatprep.subr.mxu0 0.0
  %421 = vmatpush1.msra.mxu0 %v407
  %422 = vmatprep.subr.mxu0 0.0
  %423 = vmatpush1.msra.mxu0 %v406
  %424 = vmatprep.subr.mxu0 0.0
  %425 = vmatpush1.msra.mxu0 %v405
  %426 = vmatprep.subr.mxu0 0.0
  %427 = vmatpush1.msra.mxu0 %v404
  %428 = vmatprep.subr.mxu0 0.0
  %429 = vmatpush1.msra.mxu0 %v403
  %430 = vmatprep.subr.mxu0 0.0
  %431 = vmatpush1.msra.mxu0 %v402
  %432 = vmatprep.subr.mxu0 0.0
  %433 = vmatpush1.msra.mxu0 %v401
  %434 = vmatprep.subr.mxu0 0.0
  %435 = vmatpush1.msra.mxu0 %v400
  %436 = vmatprep.subr.mxu0 0.0
  %437 = vmatpush1.msra.mxu0 %v399
  %438 = vmatprep.subr.mxu0 0.0
  %439 = vmatpush1.msra.mxu0 %v398
  %440 = vmatprep.subr.mxu0 0.0
  %441 = vmatpush1.msra.mxu0 %v397
  %442 = vmatprep.subr.mxu0 0.0
  %443 = vmatpush1.msra.mxu0 %v396
  %444 = vmatprep.subr.mxu0 0.0
  %445 = vmatpush2.msra.mxu0 0.0
  %446 = vmatprep.subr.mxu0 0.0
  %447 = vmatpush2.msra.mxu0 0.0
  %448 = vmatprep.subr.mxu0 0.0
  %449 = vmatpush2.msra.mxu0 0.0
  %450 = vmatprep.subr.mxu0 0.0
  %451 = vmatpush2.msra.mxu0 0.0
  %452 = vmatprep.subr.mxu0 0.0
  %453 = vmatpush2.msra.mxu0 0.0
  %454 = vmatprep.subr.mxu0 0.0
  %455 = vmatpush2.msra.mxu0 0.0
  %456 = vmatprep.subr.mxu0 0.0
  %457 = vmatpush2.msra.mxu0 0.0
  %458 = vmatprep.subr.mxu0 0.0
  %459 = vmatpush2.msra.mxu0 0.0
  %460 = vmatprep.subr.mxu0 0.0
  %461 = vmatpush2.msra.mxu0 0.0
  %462 = vmatprep.subr.mxu0 0.0
  %463 = vmatpush2.msra.mxu0 0.0
  %464 = vmatprep.subr.mxu0 0.0
  %465 = vmatpush2.msra.mxu0 0.0
  %466 = vmatprep.subr.mxu0 0.0
  %467 = vmatpush2.msra.mxu0 0.0
  %468 = vmatprep.subr.mxu0 0.0
  %469 = vmatpush2.msra.mxu0 0.0
  %470 = vmatprep.subr.mxu0 0.0
  %471 = vmatpush2.msra.mxu0 0.0
  %472 = vmatprep.subr.mxu0 0.0
  %473 = vmatpush2.msra.mxu0 0.0
  %474 = vmatprep.subr.mxu0 0.0
  %475 = vmatpush2.msra.mxu0 0.0
  %476 = vmatprep.mubr.f32.mxu0 0.0
  %477 = vmatmul.mubr.f32.gmra.mxu0 %v318
  %v478 = vpop.f32.mrf.mxu0
  %v479 = vadd.f32 0.0, %v478
  %v480 = vpop.f32.mrf.mxu0
  %481 = vmatprep.mubr.f32.mxu0 0.0
  %482 = vmatmul.mubr.f32.gmra.mxu0 %v323
  %v483 = vpop.f32.mrf.mxu0
  %v484 = vadd.f32 0.0, %v483
  %v485 = vpop.f32.mrf.mxu0
  %486 = vmatprep.mubr.f32.mxu0 0.0
  %487 = vmatmul.mubr.f32.gmra.mxu0 %v328
  %v488 = vpop.f32.mrf.mxu0
  %v489 = vadd.f32 0.0, %v488
  %v490 = vpop.f32.mrf.mxu0
  %491 = vmatprep.mubr.f32.mxu0 0.0
  %492 = vmatmul.mubr.f32.gmra.mxu0 %v333
  %v493 = vpop.f32.mrf.mxu0
  %v494 = vadd.f32 0.0, %v493
  %v495 = vpop.f32.mrf.mxu0
  %496 = vmatprep.mubr.f32.mxu0 0.0
  %497 = vmatmul.mubr.f32.gmra.mxu0 %v338
  %v498 = vpop.f32.mrf.mxu0
  %v499 = vadd.f32 0.0, %v498
  %v500 = vpop.f32.mrf.mxu0
  %501 = vmatprep.mubr.f32.mxu0 0.0
  %502 = vmatmul.mubr.f32.gmra.mxu0 %v343
  %v503 = vpop.f32.mrf.mxu0
  %v504 = vadd.f32 0.0, %v503
  %v505 = vpop.f32.mrf.mxu0
  %506 = vmatprep.mubr.f32.mxu0 0.0
  %507 = vmatmul.mubr.f32.gmra.mxu0 %v348
  %v508 = vpop.f32.mrf.mxu0
  %v509 = vadd.f32 0.0, %v508
  %v510 = vpop.f32.mrf.mxu0
  %511 = vmatprep.mubr.f32.mxu0 0.0
  %512 = vmatmul.mubr.f32.gmra.mxu0 %v353
  %v513 = vpop.f32.mrf.mxu0
  %v514 = vadd.f32 0.0, %v513
  %v515 = vpop.f32.mrf.mxu0
  %516 = vmatprep.mubr.f32.mxu0 0.0
  %517 = vmatmul.mubr.f32.gmra.mxu0 %v358
  %v518 = vpop.f32.mrf.mxu0
  %v519 = vadd.f32 0.0, %v518
  %v520 = vpop.f32.mrf.mxu0
  %521 = vmatprep.mubr.f32.mxu0 0.0
  %522 = vmatmul.mubr.f32.gmra.mxu0 %v363
  %v523 = vpop.f32.mrf.mxu0
  %v524 = vadd.f32 0.0, %v523
  %v525 = vpop.f32.mrf.mxu0
  %526 = vmatprep.mubr.f32.mxu0 0.0
  %527 = vmatmul.mubr.f32.gmra.mxu0 %v368
  %v528 = vpop.f32.mrf.mxu0
  %v529 = vadd.f32 0.0, %v528
  %v530 = vpop.f32.mrf.mxu0
  %531 = vmatprep.mubr.f32.mxu0 0.0
  %532 = vmatmul.mubr.f32.gmra.mxu0 %v373
  %v533 = vpop.f32.mrf.mxu0
  %v534 = vadd.f32 0.0, %v533
  %v535 = vpop.f32.mrf.mxu0
  %536 = vmatprep.mubr.f32.mxu0 0.0
  %537 = vmatmul.mubr.f32.gmra.mxu0 %v378
  %v538 = vpop.f32.mrf.mxu0
  %v539 = vadd.f32 0.0, %v538
  %v540 = vpop.f32.mrf.mxu0
  %541 = vmatprep.mubr.f32.mxu0 0.0
  %542 = vmatmul.mubr.f32.gmra.mxu0 %v383
  %v543 = vpop.f32.mrf.mxu0
  %v544 = vadd.f32 0.0, %v543
  %v545 = vpop.f32.mrf.mxu0
  %546 = vmatprep.mubr.f32.mxu0 0.0
  %547 = vmatmul.mubr.f32.gmra.mxu0 %v388
  %v548 = vpop.f32.mrf.mxu0
  %v549 = vadd.f32 0.0, %v548
  %v550 = vpop.f32.mrf.mxu0
  %551 = vmatprep.mubr.f32.mxu0 0.0
  %552 = vmatmul.mubr.f32.gmra.mxu0 %v393
  %v553 = vpop.f32.mrf.mxu0
  %v554 = vadd.f32 0.0, %v553
  %v555 = vpop.f32.mrf.mxu0
  %556 = vdwg.mxu0
  %557 = vmatprep.subr.mxu0 0.0
  %558 = vmatpush1.msra.mxu0 %v554
  %559 = vmatprep.subr.mxu0 0.0
  %560 = vmatpush1.msra.mxu0 %v549
  %561 = vmatprep.subr.mxu0 0.0
  %562 = vmatpush1.msra.mxu0 %v544
  %563 = vmatprep.subr.mxu0 0.0
  %564 = vmatpush1.msra.mxu0 %v539
  %565 = vmatprep.subr.mxu0 0.0
  %566 = vmatpush1.msra.mxu0 %v534
  %567 = vmatprep.subr.mxu0 0.0
  %568 = vmatpush1.msra.mxu0 %v529
  %569 = vmatprep.subr.mxu0 0.0
  %570 = vmatpush1.msra.mxu0 %v524
  %571 = vmatprep.subr.mxu0 0.0
  %572 = vmatpush1.msra.mxu0 %v519
  %573 = vmatprep.subr.mxu0 0.0
  %574 = vmatpush1.msra.mxu0 %v514
  %575 = vmatprep.subr.mxu0 0.0
  %576 = vmatpush1.msra.mxu0 %v509
  %577 = vmatprep.subr.mxu0 0.0
  %578 = vmatpush1.msra.mxu0 %v504
  %579 = vmatprep.subr.mxu0 0.0
  %580 = vmatpush1.msra.mxu0 %v499
  %581 = vmatprep.subr.mxu0 0.0
  %582 = vmatpush1.msra.mxu0 %v494
  %583 = vmatprep.subr.mxu0 0.0
  %584 = vmatpush1.msra.mxu0 %v489
  %585 = vmatprep.subr.mxu0 0.0
  %586 = vmatpush1.msra.mxu0 %v484
  %587 = vmatprep.subr.mxu0 0.0
  %588 = vmatpush1.msra.mxu0 %v479
  %589 = vmatprep.subr.mxu0 0.0
  %590 = vmatpush2.msra.mxu0 0.0
  %591 = vmatprep.subr.mxu0 0.0
  %592 = vmatpush2.msra.mxu0 0.0
  %593 = vmatprep.subr.mxu0 0.0
  %594 = vmatpush2.msra.mxu0 0.0
  %595 = vmatprep.subr.mxu0 0.0
  %596 = vmatpush2.msra.mxu0 0.0
  %597 = vmatprep.subr.mxu0 0.0
  %598 = vmatpush2.msra.mxu0 0.0
  %599 = vmatprep.subr.mxu0 0.0
  %600 = vmatpush2.msra.mxu0 0.0
  %601 = vmatprep.subr.mxu0 0.0
  %602 = vmatpush2.msra.mxu0 0.0
  %603 = vmatprep.subr.mxu0 0.0
  %604 = vmatpush2.msra.mxu0 0.0
  %605 = vmatprep.subr.mxu0 0.0
  %606 = vmatpush2.msra.mxu0 0.0
  %607 = vmatprep.subr.mxu0 0.0
  %608 = vmatpush2.msra.mxu0 0.0
  %609 = vmatprep.subr.mxu0 0.0
  %610 = vmatpush2.msra.mxu0 0.0
  %611 = vmatprep.subr.mxu0 0.0
  %612 = vmatpush2.msra.mxu0 0.0
  %613 = vmatprep.subr.mxu0 0.0
  %614 = vmatpush2.msra.mxu0 0.0
  %615 = vmatprep.subr.mxu0 0.0
  %616 = vmatpush2.msra.mxu0 0.0
  %617 = vmatprep.subr.mxu0 0.0
  %618 = vmatpush2.msra.mxu0 0.0
  %619 = vmatprep.subr.mxu0 0.0
  %620 = vmatpush2.msra.mxu0 0.0
  %621 = vmatprep.mubr.f32.mxu0 0.0
  %622 = vmatmul.mubr.f32.gmra.mxu0 %v17
  %v623 = vpop.f32.mrf.mxu0
  %v624 = vadd.f32 0.0, %v623
  %v625 = vpop.f32.mrf.mxu0
  %626 = vmatprep.mubr.f32.mxu0 0.0
  %627 = vmatmul.mubr.f32.gmra.mxu0 %v18
  %v628 = vpop.f32.mrf.mxu0
  %v629 = vadd.f32 0.0, %v628
  %v630 = vpop.f32.mrf.mxu0
  %631 = vmatprep.mubr.f32.mxu0 0.0
  %632 = vmatmul.mubr.f32.gmra.mxu0 %v19
  %v633 = vpop.f32.mrf.mxu0
  %v634 = vadd.f32 0.0, %v633
  %v635 = vpop.f32.mrf.mxu0
  %636 = vmatprep.mubr.f32.mxu0 0.0
  %637 = vmatmul.mubr.f32.gmra.mxu0 %v20
  %v638 = vpop.f32.mrf.mxu0
  %v639 = vadd.f32 0.0, %v638
  %v640 = vpop.f32.mrf.mxu0
  %641 = vmatprep.mubr.f32.mxu0 0.0
  %642 = vmatmul.mubr.f32.gmra.mxu0 %v21
  %v643 = vpop.f32.mrf.mxu0
  %v644 = vadd.f32 0.0, %v643
  %v645 = vpop.f32.mrf.mxu0
  %646 = vmatprep.mubr.f32.mxu0 0.0
  %647 = vmatmul.mubr.f32.gmra.mxu0 %v22
  %v648 = vpop.f32.mrf.mxu0
  %v649 = vadd.f32 0.0, %v648
  %v650 = vpop.f32.mrf.mxu0
  %651 = vmatprep.mubr.f32.mxu0 0.0
  %652 = vmatmul.mubr.f32.gmra.mxu0 %v23
  %v653 = vpop.f32.mrf.mxu0
  %v654 = vadd.f32 0.0, %v653
  %v655 = vpop.f32.mrf.mxu0
  %656 = vmatprep.mubr.f32.mxu0 0.0
  %657 = vmatmul.mubr.f32.gmra.mxu0 %v24
  %v658 = vpop.f32.mrf.mxu0
  %v659 = vadd.f32 0.0, %v658
  %v660 = vpop.f32.mrf.mxu0
  %661 = vmatprep.mubr.f32.mxu0 0.0
  %662 = vmatmul.mubr.f32.gmra.mxu0 %v25
  %v663 = vpop.f32.mrf.mxu0
  %v664 = vadd.f32 0.0, %v663
  %v665 = vpop.f32.mrf.mxu0
  %666 = vmatprep.mubr.f32.mxu0 0.0
  %667 = vmatmul.mubr.f32.gmra.mxu0 %v26
  %v668 = vpop.f32.mrf.mxu0
  %v669 = vadd.f32 0.0, %v668
  %v670 = vpop.f32.mrf.mxu0
  %671 = vmatprep.mubr.f32.mxu0 0.0
  %672 = vmatmul.mubr.f32.gmra.mxu0 %v27
  %v673 = vpop.f32.mrf.mxu0
  %v674 = vadd.f32 0.0, %v673
  %v675 = vpop.f32.mrf.mxu0
  %676 = vmatprep.mubr.f32.mxu0 0.0
  %677 = vmatmul.mubr.f32.gmra.mxu0 %v28
  %v678 = vpop.f32.mrf.mxu0
  %v679 = vadd.f32 0.0, %v678
  %v680 = vpop.f32.mrf.mxu0
  %681 = vmatprep.mubr.f32.mxu0 0.0
  %682 = vmatmul.mubr.f32.gmra.mxu0 %v29
  %v683 = vpop.f32.mrf.mxu0
  %v684 = vadd.f32 0.0, %v683
  %v685 = vpop.f32.mrf.mxu0
  %686 = vmatprep.mubr.f32.mxu0 0.0
  %687 = vmatmul.mubr.f32.gmra.mxu0 %v30
  %v688 = vpop.f32.mrf.mxu0
  %v689 = vadd.f32 0.0, %v688
  %v690 = vpop.f32.mrf.mxu0
  %691 = vmatprep.mubr.f32.mxu0 0.0
  %692 = vmatmul.mubr.f32.gmra.mxu0 %v31
  %v693 = vpop.f32.mrf.mxu0
  %v694 = vadd.f32 0.0, %v693
  %v695 = vpop.f32.mrf.mxu0
  %696 = vmatprep.mubr.f32.mxu0 0.0
  %697 = vmatmul.mubr.f32.gmra.mxu0 %v32
  %v698 = vpop.f32.mrf.mxu0
  %v699 = vadd.f32 0.0, %v698
  %v700 = vpop.f32.mrf.mxu0
  %701 = vdwg.mxu0
  %702 = vst [vmem:[%s4] sm:$0xff] %v624
  %703 = vst [vmem:[%s4 + $0x8] sm:$0xff] %v629
  %704 = vst [vmem:[%s4 + $0x10] sm:$0xff] %v634
  %705 = vst [vmem:[%s4 + $0x18] sm:$0xff] %v639
  %706 = vst [vmem:[%s4 + $0x20] sm:$0xff] %v644
  %707 = vst [vmem:[%s4 + $0x28] sm:$0xff] %v649
  %708 = vst [vmem:[%s4 + $0x30] sm:$0xff] %v654
  %709 = vst [vmem:[%s4 + $0x38] sm:$0xff] %v659
  %710 = vst [vmem:[%s4 + $0x40] sm:$0xff] %v664
  %711 = vst [vmem:[%s4 + $0x48] sm:$0xff] %v669
  %712 = vst [vmem:[%s4 + $0x50] sm:$0xff] %v674
  %713 = vst [vmem:[%s4 + $0x58] sm:$0xff] %v679
  %714 = vst [vmem:[%s4 + $0x60] sm:$0xff] %v684
  %715 = vst [vmem:[%s4 + $0x68] sm:$0xff] %v689
  %716 = vst [vmem:[%s4 + $0x70] sm:$0xff] %v694
  %717 = vst [vmem:[%s4 + $0x78] sm:$0xff] %v699
  // Predicated region
  $region18: #{gmn_forward.1} parent=0 // pred_check
    _
  $region19: #{gmn_forward.1} parent=0 // pred_check_branch
    %719 = sbr.rel (0) target = $region21
  $region20: #{gmn_forward.1} parent=0 // pred_region
    _
  $region21: #{gmn_forward.1} parent=0 // pred_fallthru
    _
  // Predicated region
  $region22: #{gmn_forward.1} parent=0 // pred_check
    _
  $region23: #{gmn_forward.1} parent=0 // pred_check_branch
    %721 = sbr.rel (0) target = $region25
  $region24: #{gmn_forward.1} parent=0 // pred_region
    _
  $region25: #{gmn_forward.1} parent=0 // pred_fallthru
    _

</llo_original>
